<compile_context>
chip_gen: v5e
topology: v5e:2x2
jax: 0.10.0
libtpu: 0.0.40
codegen_flags: <defaults>
</compile_context>

<pallas_src>
import numpy as np
import jax
import jax.numpy as jnp
from jax.experimental import pallas as pl
from jax.experimental.pallas import tpu as pltpu

# ---- static config (small shapes consistent with the module) ----
B = 2                      # number of graphs
N_MAX_NODES = 8
N_NODES = B * N_MAX_NODES  # 16 nodes total
INPUT_DIM = 4
HIDDEN_ENC = 32
HIDDEN_DEC = 32
LATENT_DIM = 16
N_LAYERS_ENC = 2
N_LAYERS_DEC = 3
COND_DIM = 7
COND_HID = 5
C_EDGES = N_MAX_NODES * (N_MAX_NODES - 1) // 2   # 28 strict-upper-triangle entries
BN_EPS = 1e-5
LANES = 128
ROW_ALIGN = 8
IN_ROWS = N_NODES + ROW_ALIGN                    # packed per-call input block rows (24)


# ---------------- packed-parameter layout (static, 8-row-aligned offsets) ----------------
class ParamLayout:
    def __init__(self):
        self.entries = {}      # name -> (row_offset, rows, cols)
        self.total_rows = 0

    def add(self, name, rows, cols):
        self.entries[name] = (self.total_rows, rows, cols)
        self.total_rows += -(-rows // ROW_ALIGN) * ROW_ALIGN


def build_layout():
    L = ParamLayout()
    # merged (encoder+decoder) conditional embedding
    L.add("cond_w1m", COND_DIM, 2 * COND_HID)
    L.add("cond_b1m", 1, 2 * COND_HID)
    L.add("cond_w2m", 2 * COND_HID, 2 * COND_HID)
    L.add("cond_b2m", 1, 2 * COND_HID)
    din = INPUT_DIM
    for l in range(N_LAYERS_ENC):
        L.add(f"gin{l}_wa", din, HIDDEN_ENC)
        L.add(f"gin{l}_ba", 1, HIDDEN_ENC)
        L.add(f"gin{l}_wb", HIDDEN_ENC, HIDDEN_ENC)
        L.add(f"gin{l}_bb", 1, HIDDEN_ENC)
        din = HIDDEN_ENC
    L.add("fc_wc", COND_HID, HIDDEN_ENC)
    L.add("fc_wp", HIDDEN_ENC, HIDDEN_ENC)
    L.add("fc_b", 1, HIDDEN_ENC)
    # fused fc_mu -> decoder latent Linear
    L.add("mulat_w", HIDDEN_ENC, HIDDEN_DEC)
    L.add("mulat_b", 1, HIDDEN_DEC)
    L.add("dec_mlp0_wc", COND_HID, HIDDEN_DEC)
    L.add("dec_mlp0_wl", HIDDEN_DEC, HIDDEN_DEC)
    L.add("dec_mlp0_b", 1, HIDDEN_DEC)
    L.add("head_wdiff", HIDDEN_DEC, C_EDGES)
    L.add("head_bdiff", 1, C_EDGES)
    # call-invariant graph glue packed into the same slab (one DMA total for all of it)
    L.add("A_aug", N_NODES, N_NODES)             # I + A  (GIN self-loop folded, eps=0)
    L.add("P", ROW_ALIGN, N_NODES)               # global_add_pool matrix, batch-row padded
    L.add("gdiff", ROW_ALIGN, LANES)             # gumbel(class0)-gumbel(class1), pad=-1e30
    return L


# ---------------- Pallas kernel (whole forward, single block, 2 input DMAs) --------------
def make_kernel(layout):
    ent = dict(layout.entries)

    def kernel(inp_ref, w_ref, out_ref):
        def mm(a, b):
            return jax.lax.dot_general(a, b, (((1,), (0,)), ((), ())),
                                       preferred_element_type=jnp.float32)

        relu = lambda v: jnp.maximum(v, 0.0)
        lrelu = lambda v: jnp.where(v >= 0.0, v, 0.2 * v)   # LeakyReLU(0.2)

        def W(name, full_lanes=False):
            off, rows, cols = ent[name]
            if full_lanes:
                return w_ref[off:off + rows, :]              # static, 8-aligned view
            return w_ref[off:off + rows, :cols]

        # per-call inputs packed into one block: node features + (padded) cond rows
        x = inp_ref[:N_NODES, :INPUT_DIM]                    # (16, 4)
        cond = inp_ref[N_NODES:N_NODES + ROW_ALIGN, :COND_DIM]   # (8, 7), rows B..7 zero

        A = W("A_aug")                                       # (16, 16) = I + adjacency
        P = W("P")                                           # (8, 16)
        gdiff = W("gdiff", full_lanes=True)                  # (8, 128)

        # ---- merged encoder+decoder cond embeddings (enc BN folded into layer-1) ----
        h = relu(mm(cond, W("cond_w1m")) + W("cond_b1m"))    # (8, 10)
        cc = relu(mm(h, W("cond_w2m")) + W("cond_b2m"))      # (8, 10) block-diag layer 2
        ce = cc[:, :COND_HID]                                # encoder cond embedding (8,5)
        cd = cc[:, COND_HID:2 * COND_HID]                    # decoder cond embedding (8,5)

        # ---- GINConv stack (eps=0 folded into A; dropout = identity; BN folded) ----
        for l in range(N_LAYERS_ENC):
            z = mm(A, x)                                     # (I + A) @ x
            z = lrelu(mm(z, W(f"gin{l}_wa")) + W(f"gin{l}_ba"))
            x = lrelu(mm(z, W(f"gin{l}_wb")) + W(f"gin{l}_bb"))

        pooled = mm(P, x)                                    # global_add_pool -> (8, 32)

        # ---- concat(cond_emb, pooled) -> BN -> fc, folded into split fc weights ----
        xg = mm(ce, W("fc_wc")) + mm(pooled, W("fc_wp")) + W("fc_b")

        # ---- fc_mu fused with decoder latent Linear (eval reparameterize == mu) ----
        lat = relu(mm(xg, W("mulat_w")) + W("mulat_b"))      # (8, 32)

        # ---- decoder mlp[0] on concat(cond_emb_dec, latent_emb), split weights ----
        h1 = relu(mm(cd, W("dec_mlp0_wc")) + mm(lat, W("dec_mlp0_wl")) + W("dec_mlp0_b"))

        # merged 2-class head + hard Gumbel argmax (class-0 indicator).
        # Full 128-lane weights/bias (zero-padded past C_EDGES); padded gdiff = -1e30
        # forces padded rows/lanes to 0. Full (8,128) tile -> unmasked store.
        ld = mm(h1, W("head_wdiff", full_lanes=True)) + W("head_bdiff", full_lanes=True)
        out_ref[...] = jnp.where(ld + gdiff >= 0.0, 1.0, 0.0)

    return kernel


_LAYOUT = build_layout()
_KERNEL = make_kernel(_LAYOUT)
_IU, _JU = np.triu_indices(N_MAX_NODES, 1)   # static, built once


# ---------------- synthetic parameters (PyTorch-structured) ----------------
def init_raw_params(key):
    keys = iter(jax.random.split(key, 80))

    def w(shape, scale=0.2):
        return scale * jax.random.normal(next(keys), shape, dtype=jnp.float32)

    def b(d):
        return 0.05 * jax.random.normal(next(keys), (1, d), dtype=jnp.float32)

    def bn(d):
        return dict(
            gamma=1.0 + 0.05 * jax.random.normal(next(keys), (1, d), dtype=jnp.float32),
            beta=0.05 * jax.random.normal(next(keys), (1, d), dtype=jnp.float32),
            mean=0.05 * jax.random.normal(next(keys), (1, d), dtype=jnp.float32),
            var=1.0 + 0.1 * jax.random.uniform(next(keys), (1, d), dtype=jnp.float32),
        )

    p = {}
    # encoder cond_layers: Linear(7,5) -> BN(5) -> ReLU -> Linear(5,5) -> ReLU
    p["enc_cond_w1"] = w((COND_DIM, COND_HID)); p["enc_cond_b1"] = b(COND_HID)
    p["enc_cond_bn"] = bn(COND_HID)
    p["enc_cond_w2"] = w((COND_HID, COND_HID)); p["enc_cond_b2"] = b(COND_HID)
    # GINConv mlps: Linear -> LReLU -> BN -> Linear -> LReLU
    din = INPUT_DIM
    for l in range(N_LAYERS_ENC):
        p[f"gin{l}_wa"] = w((din, HIDDEN_ENC)); p[f"gin{l}_ba"] = b(HIDDEN_ENC)
        p[f"gin{l}_bn"] = bn(HIDDEN_ENC)
        p[f"gin{l}_wb"] = w((HIDDEN_ENC, HIDDEN_ENC)); p[f"gin{l}_bb"] = b(HIDDEN_ENC)
        din = HIDDEN_ENC
    # post-concat BatchNorm1d(Ch + H) and fc: Linear(Ch + H, H)
    p["post_bn"] = bn(COND_HID + HIDDEN_ENC)
    p["fc_w"] = w((COND_HID + HIDDEN_ENC, HIDDEN_ENC)); p["fc_b"] = b(HIDDEN_ENC)
    # fc_mu (fc_logvar unused in eval-mode output)
    p["mu_w"] = w((HIDDEN_ENC, LATENT_DIM)); p["mu_b"] = b(LATENT_DIM)
    # decoder
    p["dec_cond_w1"] = w((COND_DIM, COND_HID)); p["dec_cond_b1"] = b(COND_HID)
    p["dec_cond_w2"] = w((COND_HID, COND_HID)); p["dec_cond_b2"] = b(COND_HID)
    p["dec_lat_w"] = w((LATENT_DIM, HIDDEN_DEC)); p["dec_lat_b"] = b(HIDDEN_DEC)
    p["dec_mlp0_w"] = w((COND_HID + HIDDEN_DEC, HIDDEN_DEC)); p["dec_mlp0_b"] = b(HIDDEN_DEC)
    p["head_w"] = w((HIDDEN_DEC, 2 * C_EDGES)); p["head_b"] = b(2 * C_EDGES)
    return p


# --------- host-side BN folding, algebraic fusions, and single-slab packing ---------
def fold_and_pack(p, A_aug, P_pad, gdiff_pad, layout):
    def bn_scale(bn):
        return bn["gamma"] / jnp.sqrt(bn["var"] + BN_EPS)    # (1, d)

    f = {}
    # Linear -> BN (fold into preceding Linear): W' = W*s, b' = (b - mean)*s + beta
    s = bn_scale(p["enc_cond_bn"])
    enc_w1 = p["enc_cond_w1"] * s
    enc_b1 = (p["enc_cond_b1"] - p["enc_cond_bn"]["mean"]) * s + p["enc_cond_bn"]["beta"]
    # merged enc+dec cond embeddings: concat layer-1 columns, block-diag layer-2
    f["cond_w1m"] = jnp.concatenate([enc_w1, p["dec_cond_w1"]], axis=1)          # (7, 10)
    f["cond_b1m"] = jnp.concatenate([enc_b1, p["dec_cond_b1"]], axis=1)          # (1, 10)
    w2m = jnp.zeros((2 * COND_HID, 2 * COND_HID), jnp.float32)
    w2m = w2m.at[:COND_HID, :COND_HID].set(p["enc_cond_w2"])
    w2m = w2m.at[COND_HID:, COND_HID:].set(p["dec_cond_w2"])
    f["cond_w2m"] = w2m
    f["cond_b2m"] = jnp.concatenate([p["enc_cond_b2"], p["dec_cond_b2"]], axis=1)
    # BN -> Linear (fold into following Linear): W' = diag(s)W, b' = b + (beta - mean*s)W
    for l in range(N_LAYERS_ENC):
        bn = p[f"gin{l}_bn"]; s = bn_scale(bn)
        f[f"gin{l}_wa"] = p[f"gin{l}_wa"]; f[f"gin{l}_ba"] = p[f"gin{l}_ba"]
        f[f"gin{l}_wb"] = p[f"gin{l}_wb"] * s.T
        f[f"gin{l}_bb"] = p[f"gin{l}_bb"] + (bn["beta"] - bn["mean"] * s) @ p[f"gin{l}_wb"]
    # post-concat BN folded into the (row-split) fc; concat order is (cond_emb, pooled)
    bn = p["post_bn"]; s = bn_scale(bn)
    f["fc_wc"] = p["fc_w"][:COND_HID] * s[:, :COND_HID].T
    f["fc_wp"] = p["fc_w"][COND_HID:] * s[:, COND_HID:].T
    f["fc_b"] = p["fc_b"] + (bn["beta"] - bn["mean"] * s) @ p["fc_w"]
    # fuse fc_mu into the decoder latent Linear (no nonlinearity in between, eval mode)
    f["mulat_w"] = p["mu_w"] @ p["dec_lat_w"]
    f["mulat_b"] = p["mu_b"] @ p["dec_lat_w"] + p["dec_lat_b"]
    # decoder mlp[0]: Linear(Ch + Hd, Hd) split by rows (cond first, latent second)
    f["dec_mlp0_wc"] = p["dec_mlp0_w"][:COND_HID]
    f["dec_mlp0_wl"] = p["dec_mlp0_w"][COND_HID:]
    f["dec_mlp0_b"] = p["dec_mlp0_b"]
    # merged 2-class head: reshape (B, C, 2) pairs output columns (2k, 2k+1)
    f["head_wdiff"] = p["head_w"][:, 0::2] - p["head_w"][:, 1::2]
    f["head_bdiff"] = p["head_b"][:, 0::2] - p["head_b"][:, 1::2]
    # call-invariant graph glue packed alongside the parameters
    f["A_aug"] = A_aug
    f["P"] = P_pad
    f["gdiff"] = gdiff_pad

    slab = jnp.zeros((layout.total_rows, LANES), jnp.float32)
    for name, (off, rows, cols) in layout.entries.items():
        arr = f[name].astype(jnp.float32)
        assert arr.shape == (rows, cols), (name, arr.shape, (rows, cols))
        slab = slab.at[off:off + rows, :cols].set(arr)
    return slab


# ---------------- jitted forward: one pallas_call + trivial XLA scatter/symmetrize -------
@jax.jit
def cond_vae_forward(x_nodes, cond, param_slab):
    # pack the two per-call inputs into one block -> a single input DMA for activations
    inp = jnp.zeros((IN_ROWS, LANES), jnp.float32)
    inp = inp.at[:N_NODES, :INPUT_DIM].set(x_nodes)
    inp = inp.at[N_NODES:N_NODES + B, :COND_DIM].set(cond)

    y = pl.pallas_call(
        _KERNEL,
        out_shape=jax.ShapeDtypeStruct((ROW_ALIGN, LANES), jnp.float32),  # full (8,128) tile
        in_specs=[pl.BlockSpec(memory_space=pltpu.MemorySpace.VMEM)] * 2,
        out_specs=pl.BlockSpec(memory_space=pltpu.MemorySpace.VMEM),
    )(inp, param_slab)

    y = y[:B, :C_EDGES]
    # pure layout op kept outside the kernel (per perf review): scatter + symmetrize
    adj = jnp.zeros((B, N_MAX_NODES, N_MAX_NODES), jnp.float32).at[:, _IU, _JU].set(y)
    return adj + jnp.swapaxes(adj, 1, 2)


if __name__ == "__main__":
    key = jax.random.PRNGKey(0)
    k_x, k_c, k_p, k_g = jax.random.split(key, 4)

    # node features and conditioning vector
    x_nodes = jax.random.normal(k_x, (N_NODES, INPUT_DIM), dtype=jnp.float32)
    cond = jax.random.normal(k_c, (B, COND_DIM), dtype=jnp.float32)

    # graph glue built ONCE on the host (numpy): two 8-node rings, both edge directions.
    # Self-loop (GIN eps=0) folded into A -> A' = I + A.
    A_np = np.eye(N_NODES, dtype=np.float32)
    P_np = np.zeros((ROW_ALIGN, N_NODES), np.float32)     # batch-row padded to 8 sublanes
    for g in range(B):
        off = g * N_MAX_NODES
        P_np[g, off:off + N_MAX_NODES] = 1.0
        for i in range(N_MAX_NODES):
            j = (i + 1) % N_MAX_NODES
            A_np[off + j, off + i] = 1.0
            A_np[off + i, off + j] = 1.0
    A_aug = jnp.asarray(A_np)
    P_pad = jnp.asarray(P_np)

    # deterministic Gumbel noise merged into the class-difference term; padded rows/lanes
    # filled with -1e30 so padded output entries are exactly 0.0.
    gum = jax.random.gumbel(k_g, (B, C_EDGES, 2), dtype=jnp.float32)
    gdiff_pad = jnp.full((ROW_ALIGN, LANES), -1e30, jnp.float32)
    gdiff_pad = gdiff_pad.at[:B, :C_EDGES].set(gum[:, :, 0] - gum[:, :, 1])

    # parameters: init once, fold BN / fuse mu->dec_lat / merge cond embeddings & heads,
    # pack params + call-invariant graph glue into a single slab once.
    raw_params = init_raw_params(k_p)
    param_slab = fold_and_pack(raw_params, A_aug, P_pad, gdiff_pad, _LAYOUT)

    adj = cond_vae_forward(x_nodes, cond, param_slab)
    adj = jax.block_until_ready(adj)
    assert adj.shape == (B, N_MAX_NODES, N_MAX_NODES)
    assert bool(jnp.all(adj == jnp.swapaxes(adj, 1, 2)))   # symmetric adjacency
    assert bool(jnp.all((adj == 0.0) | (adj == 1.0)))      # hard gumbel output
    assert bool(jnp.all(jnp.diagonal(adj, axis1=1, axis2=2) == 0.0))  # no self-edges
    print("KERNEL_OK")
</pallas_src>

<mosaic_0001>
module attributes {stable_mosaic.version = 11 : i64} {
  func.func @kernel(%arg0: memref<24x128xf32, #tpu.memory_space<vmem>>, %arg1: memref<384x128xf32, #tpu.memory_space<vmem>>, %arg2: memref<8x128xf32, #tpu.memory_space<vmem>>) attributes {dimension_semantics = [], scalar_prefetch = 0 : i64, scratch_operands = 0 : i64, tpu.core_type = #tpu.core_type<tc>} {
    %c0 = arith.constant 0 : index
    %c0_0 = arith.constant 0 : index
    %0 = vector.load %arg0[%c0, %c0_0] : memref<24x128xf32, #tpu.memory_space<vmem>>, vector<16x4xf32>
    %c16 = arith.constant 16 : index
    %c0_1 = arith.constant 0 : index
    %1 = vector.load %arg0[%c16, %c0_1] : memref<24x128xf32, #tpu.memory_space<vmem>>, vector<8x7xf32>
    %c352 = arith.constant 352 : index
    %c0_2 = arith.constant 0 : index
    %2 = vector.load %arg1[%c352, %c0_2] : memref<384x128xf32, #tpu.memory_space<vmem>>, vector<16x16xf32>
    %c368 = arith.constant 368 : index
    %c0_3 = arith.constant 0 : index
    %3 = vector.load %arg1[%c368, %c0_3] : memref<384x128xf32, #tpu.memory_space<vmem>>, vector<8x16xf32>
    %c376 = arith.constant 376 : index
    %c0_4 = arith.constant 0 : index
    %4 = vector.load %arg1[%c376, %c0_4] : memref<384x128xf32, #tpu.memory_space<vmem>>, vector<8x128xf32>
    %c0_5 = arith.constant 0 : index
    %c0_6 = arith.constant 0 : index
    %5 = vector.load %arg1[%c0_5, %c0_6] : memref<384x128xf32, #tpu.memory_space<vmem>>, vector<7x10xf32>
    %cst = arith.constant dense<0.000000e+00> : vector<8x10xf32>
    %6 = tpu.matmul %1, %5, %cst {dimension_numbers = #tpu.dot_dimension_numbers<[1], [0], [0], [1], [0, 0, 1, 1], [], []>} : vector<8x7xf32>, vector<7x10xf32>, vector<8x10xf32> -> vector<8x10xf32>
    %c8 = arith.constant 8 : index
    %c0_7 = arith.constant 0 : index
    %7 = vector.load %arg1[%c8, %c0_7] : memref<384x128xf32, #tpu.memory_space<vmem>>, vector<1x10xf32>
    %8 = vector.broadcast %7 : vector<1x10xf32> to vector<8x10xf32>
    %9 = arith.addf %6, %8 : vector<8x10xf32>
    %cst_8 = arith.constant 0.000000e+00 : f32
    %10 = vector.broadcast %cst_8 : f32 to vector<8x10xf32>
    %11 = arith.maximumf %9, %10 : vector<8x10xf32>
    %c16_9 = arith.constant 16 : index
    %c0_10 = arith.constant 0 : index
    %12 = vector.load %arg1[%c16_9, %c0_10] : memref<384x128xf32, #tpu.memory_space<vmem>>, vector<10x10xf32>
    %cst_11 = arith.constant dense<0.000000e+00> : vector<8x10xf32>
    %13 = tpu.matmul %11, %12, %cst_11 {dimension_numbers = #tpu.dot_dimension_numbers<[1], [0], [0], [1], [0, 0, 1, 1], [], []>} : vector<8x10xf32>, vector<10x10xf32>, vector<8x10xf32> -> vector<8x10xf32>
    %c32 = arith.constant 32 : index
    %c0_12 = arith.constant 0 : index
    %14 = vector.load %arg1[%c32, %c0_12] : memref<384x128xf32, #tpu.memory_space<vmem>>, vector<1x10xf32>
    %15 = vector.broadcast %14 : vector<1x10xf32> to vector<8x10xf32>
    %16 = arith.addf %13, %15 : vector<8x10xf32>
    %cst_13 = arith.constant 0.000000e+00 : f32
    %17 = vector.broadcast %cst_13 : f32 to vector<8x10xf32>
    %18 = arith.maximumf %16, %17 : vector<8x10xf32>
    %19 = vector.extract_strided_slice %18 {offsets = [0, 0], sizes = [8, 5], strides = [1, 1]} : vector<8x10xf32> to vector<8x5xf32>
    %20 = vector.extract_strided_slice %18 {offsets = [0, 5], sizes = [8, 5], strides = [1, 1]} : vector<8x10xf32> to vector<8x5xf32>
    %cst_14 = arith.constant dense<0.000000e+00> : vector<16x4xf32>
    %21 = tpu.matmul %2, %0, %cst_14 {dimension_numbers = #tpu.dot_dimension_numbers<[1], [0], [0], [1], [0, 0, 1, 1], [], []>} : vector<16x16xf32>, vector<16x4xf32>, vector<16x4xf32> -> vector<16x4xf32>
    %c40 = arith.constant 40 : index
    %c0_15 = arith.constant 0 : index
    %22 = vector.load %arg1[%c40, %c0_15] : memref<384x128xf32, #tpu.memory_space<vmem>>, vector<4x32xf32>
    %cst_16 = arith.constant dense<0.000000e+00> : vector<16x32xf32>
    %23 = tpu.matmul %21, %22, %cst_16 {dimension_numbers = #tpu.dot_dimension_numbers<[1], [0], [0], [1], [0, 0, 1, 1], [], []>} : vector<16x4xf32>, vector<4x32xf32>, vector<16x32xf32> -> vector<16x32xf32>
    %c48 = arith.constant 48 : index
    %c0_17 = arith.constant 0 : index
    %24 = vector.load %arg1[%c48, %c0_17] : memref<384x128xf32, #tpu.memory_space<vmem>>, vector<1x32xf32>
    %25 = vector.broadcast %24 : vector<1x32xf32> to vector<16x32xf32>
    %26 = arith.addf %23, %25 : vector<16x32xf32>
    %cst_18 = arith.constant 0.000000e+00 : f32
    %27 = vector.broadcast %cst_18 : f32 to vector<16x32xf32>
    %28 = arith.cmpf oge, %26, %27 : vector<16x32xf32>
    %cst_19 = arith.constant 2.000000e-01 : f32
    %29 = vector.broadcast %cst_19 : f32 to vector<16x32xf32>
    %30 = arith.mulf %29, %26 : vector<16x32xf32>
    %31 = arith.select %28, %26, %30 : vector<16x32xi1>, vector<16x32xf32>
    %c56 = arith.constant 56 : index
    %c0_20 = arith.constant 0 : index
    %32 = vector.load %arg1[%c56, %c0_20] : memref<384x128xf32, #tpu.memory_space<vmem>>, vector<32x32xf32>
    %cst_21 = arith.constant dense<0.000000e+00> : vector<16x32xf32>
    %33 = tpu.matmul %31, %32, %cst_21 {dimension_numbers = #tpu.dot_dimension_numbers<[1], [0], [0], [1], [0, 0, 1, 1], [], []>} : vector<16x32xf32>, vector<32x32xf32>, vector<16x32xf32> -> vector<16x32xf32>
    %c88 = arith.constant 88 : index
    %c0_22 = arith.constant 0 : index
    %34 = vector.load %arg1[%c88, %c0_22] : memref<384x128xf32, #tpu.memory_space<vmem>>, vector<1x32xf32>
    %35 = vector.broadcast %34 : vector<1x32xf32> to vector<16x32xf32>
    %36 = arith.addf %33, %35 : vector<16x32xf32>
    %cst_23 = arith.constant 0.000000e+00 : f32
    %37 = vector.broadcast %cst_23 : f32 to vector<16x32xf32>
    %38 = arith.cmpf oge, %36, %37 : vector<16x32xf32>
    %cst_24 = arith.constant 2.000000e-01 : f32
    %39 = vector.broadcast %cst_24 : f32 to vector<16x32xf32>
    %40 = arith.mulf %39, %36 : vector<16x32xf32>
    %41 = arith.select %38, %36, %40 : vector<16x32xi1>, vector<16x32xf32>
    %cst_25 = arith.constant dense<0.000000e+00> : vector<16x32xf32>
    %42 = tpu.matmul %2, %41, %cst_25 {dimension_numbers = #tpu.dot_dimension_numbers<[1], [0], [0], [1], [0, 0, 1, 1], [], []>} : vector<16x16xf32>, vector<16x32xf32>, vector<16x32xf32> -> vector<16x32xf32>
    %c96 = arith.constant 96 : index
    %c0_26 = arith.constant 0 : index
    %43 = vector.load %arg1[%c96, %c0_26] : memref<384x128xf32, #tpu.memory_space<vmem>>, vector<32x32xf32>
    %cst_27 = arith.constant dense<0.000000e+00> : vector<16x32xf32>
    %44 = tpu.matmul %42, %43, %cst_27 {dimension_numbers = #tpu.dot_dimension_numbers<[1], [0], [0], [1], [0, 0, 1, 1], [], []>} : vector<16x32xf32>, vector<32x32xf32>, vector<16x32xf32> -> vector<16x32xf32>
    %c128 = arith.constant 128 : index
    %c0_28 = arith.constant 0 : index
    %45 = vector.load %arg1[%c128, %c0_28] : memref<384x128xf32, #tpu.memory_space<vmem>>, vector<1x32xf32>
    %46 = vector.broadcast %45 : vector<1x32xf32> to vector<16x32xf32>
    %47 = arith.addf %44, %46 : vector<16x32xf32>
    %cst_29 = arith.constant 0.000000e+00 : f32
    %48 = vector.broadcast %cst_29 : f32 to vector<16x32xf32>
    %49 = arith.cmpf oge, %47, %48 : vector<16x32xf32>
    %cst_30 = arith.constant 2.000000e-01 : f32
    %50 = vector.broadcast %cst_30 : f32 to vector<16x32xf32>
    %51 = arith.mulf %50, %47 : vector<16x32xf32>
    %52 = arith.select %49, %47, %51 : vector<16x32xi1>, vector<16x32xf32>
    %c136 = arith.constant 136 : index
    %c0_31 = arith.constant 0 : index
    %53 = vector.load %arg1[%c136, %c0_31] : memref<384x128xf32, #tpu.memory_space<vmem>>, vector<32x32xf32>
    %cst_32 = arith.constant dense<0.000000e+00> : vector<16x32xf32>
    %54 = tpu.matmul %52, %53, %cst_32 {dimension_numbers = #tpu.dot_dimension_numbers<[1], [0], [0], [1], [0, 0, 1, 1], [], []>} : vector<16x32xf32>, vector<32x32xf32>, vector<16x32xf32> -> vector<16x32xf32>
    %c168 = arith.constant 168 : index
    %c0_33 = arith.constant 0 : index
    %55 = vector.load %arg1[%c168, %c0_33] : memref<384x128xf32, #tpu.memory_space<vmem>>, vector<1x32xf32>
    %56 = vector.broadcast %55 : vector<1x32xf32> to vector<16x32xf32>
    %57 = arith.addf %54, %56 : vector<16x32xf32>
    %cst_34 = arith.constant 0.000000e+00 : f32
    %58 = vector.broadcast %cst_34 : f32 to vector<16x32xf32>
    %59 = arith.cmpf oge, %57, %58 : vector<16x32xf32>
    %cst_35 = arith.constant 2.000000e-01 : f32
    %60 = vector.broadcast %cst_35 : f32 to vector<16x32xf32>
    %61 = arith.mulf %60, %57 : vector<16x32xf32>
    %62 = arith.select %59, %57, %61 : vector<16x32xi1>, vector<16x32xf32>
    %cst_36 = arith.constant dense<0.000000e+00> : vector<8x32xf32>
    %63 = tpu.matmul %3, %62, %cst_36 {dimension_numbers = #tpu.dot_dimension_numbers<[1], [0], [0], [1], [0, 0, 1, 1], [], []>} : vector<8x16xf32>, vector<16x32xf32>, vector<8x32xf32> -> vector<8x32xf32>
    %c176 = arith.constant 176 : index
    %c0_37 = arith.constant 0 : index
    %64 = vector.load %arg1[%c176, %c0_37] : memref<384x128xf32, #tpu.memory_space<vmem>>, vector<5x32xf32>
    %cst_38 = arith.constant dense<0.000000e+00> : vector<8x32xf32>
    %65 = tpu.matmul %19, %64, %cst_38 {dimension_numbers = #tpu.dot_dimension_numbers<[1], [0], [0], [1], [0, 0, 1, 1], [], []>} : vector<8x5xf32>, vector<5x32xf32>, vector<8x32xf32> -> vector<8x32xf32>
    %c184 = arith.constant 184 : index
    %c0_39 = arith.constant 0 : index
    %66 = vector.load %arg1[%c184, %c0_39] : memref<384x128xf32, #tpu.memory_space<vmem>>, vector<32x32xf32>
    %cst_40 = arith.constant dense<0.000000e+00> : vector<8x32xf32>
    %67 = tpu.matmul %63, %66, %cst_40 {dimension_numbers = #tpu.dot_dimension_numbers<[1], [0], [0], [1], [0, 0, 1, 1], [], []>} : vector<8x32xf32>, vector<32x32xf32>, vector<8x32xf32> -> vector<8x32xf32>
    %68 = arith.addf %65, %67 : vector<8x32xf32>
    %c216 = arith.constant 216 : index
    %c0_41 = arith.constant 0 : index
    %69 = vector.load %arg1[%c216, %c0_41] : memref<384x128xf32, #tpu.memory_space<vmem>>, vector<1x32xf32>
    %70 = vector.broadcast %69 : vector<1x32xf32> to vector<8x32xf32>
    %71 = arith.addf %68, %70 : vector<8x32xf32>
    %c224 = arith.constant 224 : index
    %c0_42 = arith.constant 0 : index
    %72 = vector.load %arg1[%c224, %c0_42] : memref<384x128xf32, #tpu.memory_space<vmem>>, vector<32x32xf32>
    %cst_43 = arith.constant dense<0.000000e+00> : vector<8x32xf32>
    %73 = tpu.matmul %71, %72, %cst_43 {dimension_numbers = #tpu.dot_dimension_numbers<[1], [0], [0], [1], [0, 0, 1, 1], [], []>} : vector<8x32xf32>, vector<32x32xf32>, vector<8x32xf32> -> vector<8x32xf32>
    %c256 = arith.constant 256 : index
    %c0_44 = arith.constant 0 : index
    %74 = vector.load %arg1[%c256, %c0_44] : memref<384x128xf32, #tpu.memory_space<vmem>>, vector<1x32xf32>
    %75 = vector.broadcast %74 : vector<1x32xf32> to vector<8x32xf32>
    %76 = arith.addf %73, %75 : vector<8x32xf32>
    %cst_45 = arith.constant 0.000000e+00 : f32
    %77 = vector.broadcast %cst_45 : f32 to vector<8x32xf32>
    %78 = arith.maximumf %76, %77 : vector<8x32xf32>
    %c264 = arith.constant 264 : index
    %c0_46 = arith.constant 0 : index
    %79 = vector.load %arg1[%c264, %c0_46] : memref<384x128xf32, #tpu.memory_space<vmem>>, vector<5x32xf32>
    %cst_47 = arith.constant dense<0.000000e+00> : vector<8x32xf32>
    %80 = tpu.matmul %20, %79, %cst_47 {dimension_numbers = #tpu.dot_dimension_numbers<[1], [0], [0], [1], [0, 0, 1, 1], [], []>} : vector<8x5xf32>, vector<5x32xf32>, vector<8x32xf32> -> vector<8x32xf32>
    %c272 = arith.constant 272 : index
    %c0_48 = arith.constant 0 : index
    %81 = vector.load %arg1[%c272, %c0_48] : memref<384x128xf32, #tpu.memory_space<vmem>>, vector<32x32xf32>
    %cst_49 = arith.constant dense<0.000000e+00> : vector<8x32xf32>
    %82 = tpu.matmul %78, %81, %cst_49 {dimension_numbers = #tpu.dot_dimension_numbers<[1], [0], [0], [1], [0, 0, 1, 1], [], []>} : vector<8x32xf32>, vector<32x32xf32>, vector<8x32xf32> -> vector<8x32xf32>
    %83 = arith.addf %80, %82 : vector<8x32xf32>
    %c304 = arith.constant 304 : index
    %c0_50 = arith.constant 0 : index
    %84 = vector.load %arg1[%c304, %c0_50] : memref<384x128xf32, #tpu.memory_space<vmem>>, vector<1x32xf32>
    %85 = vector.broadcast %84 : vector<1x32xf32> to vector<8x32xf32>
    %86 = arith.addf %83, %85 : vector<8x32xf32>
    %cst_51 = arith.constant 0.000000e+00 : f32
    %87 = vector.broadcast %cst_51 : f32 to vector<8x32xf32>
    %88 = arith.maximumf %86, %87 : vector<8x32xf32>
    %c312 = arith.constant 312 : index
    %c0_52 = arith.constant 0 : index
    %89 = vector.load %arg1[%c312, %c0_52] : memref<384x128xf32, #tpu.memory_space<vmem>>, vector<32x128xf32>
    %cst_53 = arith.constant dense<0.000000e+00> : vector<8x128xf32>
    %90 = tpu.matmul %88, %89, %cst_53 {dimension_numbers = #tpu.dot_dimension_numbers<[1], [0], [0], [1], [0, 0, 1, 1], [], []>} : vector<8x32xf32>, vector<32x128xf32>, vector<8x128xf32> -> vector<8x128xf32>
    %c344 = arith.constant 344 : index
    %c0_54 = arith.constant 0 : index
    %91 = vector.load %arg1[%c344, %c0_54] : memref<384x128xf32, #tpu.memory_space<vmem>>, vector<1x128xf32>
    %92 = vector.broadcast %91 : vector<1x128xf32> to vector<8x128xf32>
    %93 = arith.addf %90, %92 : vector<8x128xf32>
    %94 = arith.addf %93, %4 : vector<8x128xf32>
    %cst_55 = arith.constant 0.000000e+00 : f32
    %95 = vector.broadcast %cst_55 : f32 to vector<8x128xf32>
    %96 = arith.cmpf oge, %94, %95 : vector<8x128xf32>
    %cst_56 = arith.constant 1.000000e+00 : f32
    %cst_57 = arith.constant 0.000000e+00 : f32
    %97 = vector.broadcast %cst_56 : f32 to vector<8x128xf32>
    %98 = vector.broadcast %cst_57 : f32 to vector<8x128xf32>
    %99 = arith.select %96, %97, %98 : vector<8x128xi1>, vector<8x128xf32>
    %c0_58 = arith.constant 0 : index
    %c0_59 = arith.constant 0 : index
    %100 = vector.load %arg2[%c0_58, %c0_59] : memref<8x128xf32, #tpu.memory_space<vmem>>, vector<8x128xf32>
    tpu.vector_store %arg2[%c0_58, %c0_59], %99 {strides = array<i32>} : memref<8x128xf32, #tpu.memory_space<vmem>>, vector<8x128xf32>,
    return
  }
}

</mosaic_0001>

<llo_original>
// kernel: cond_vae_forward.1
$region0: #{cond_vae_forward.1}
  #allocation0 [shape = 'u32[]', space=smem, size = 0x4, offset = 0x4, fixed_abs, tag = 'smem constant byte address 0x4 - core index']
  #allocation1 [shape = 'u32[72,128]{1,0:T(1,128)}', space=vmem, size = 0x9000, scoped, tag = 'internal scratch']
  %s0 = inlined_call_operand.vmem [shape: f32[24,128], index: 0, kind: input, shape index: {}]
  %s1 = inlined_call_operand.hbm [shape: f32[384,128], index: 1, kind: input, shape index: {}]
  %s2 = inlined_call_operand.vmem [shape: f32[8,128], index: 2, kind: output, shape index: {}]
  %s3 = sld [smem:[#allocation0]]
  $region22: #{cond_vae_forward.1} parent=0
    _
  %s5 = ssub.s32 1, %s3
  %s6 = scalar_select 0, %s5, %s3
  $region1: #{cond_vae_forward.1} parent=0
    #allocation2 [shape = 'u8[196608]{0}', space=vmem, size = 0x30000, scoped, tag = 'input window, operand 1, single buffered']
    #allocation3 [shape = 's32[1]{0}', space=sflag, size = 0x4, scoped, tag = 'scoped memory for cond_vae_forward.1']
    %7 = vsyncpa [#allocation3], 0
    // Predicated region
    $region2: #{cond_vae_forward.1} parent=1 // pred_check
      _
    $region3: #{cond_vae_forward.1} parent=1 // pred_check_branch
      %9 = sbr.rel (0) target = $region5
    $region4: #{cond_vae_forward.1} parent=1 // pred_region
      _
    $region5: #{cond_vae_forward.1} parent=1 // pred_fallthru
      _
    // Predicated region
    $region6: #{cond_vae_forward.1} parent=1 // pred_check
      _
    $region7: #{cond_vae_forward.1} parent=1 // pred_check_branch
      %11 = sbr.rel (0) target = $region9
    $region8: #{cond_vae_forward.1} parent=1 // pred_region
      %13 = vsyncadd [#allocation3], 0
      %s14 = sshll.u32 %s1, 4
      %s15 = int_to_ptr.hbm [resolvable:$true] %s14
      %s16 = sshll.u32 [#allocation2], 4
      %s17 = int_to_ptr.vmem [resolvable:$true] %s16
      %22 = dma.hbm_to_vmem [thread:$0]  %s15, 6144, %s17, [#allocation3], 128, 128, 8
    $region9: #{cond_vae_forward.1} parent=1 // pred_fallthru
      _
    // Predicated region
    $region10: #{cond_vae_forward.1} parent=1 // pred_check
      _
    $region11: #{cond_vae_forward.1} parent=1 // pred_check_branch
      %24 = sbr.rel (0) target = $region13
    $region12: #{cond_vae_forward.1} parent=1 // pred_region
      %26 = dma.done [#allocation3], 6144
    $region13: #{cond_vae_forward.1} parent=1 // pred_fallthru
      _
    %v27 = vld [vmem:[%s0] sm:$0xff]
    %v28 = vld [vmem:[%s0 + $0x8] sm:$0xff]
    %v29 = vld [vmem:[%s0 + $0x10] sm:$0xff]
    %v30 = vld [vmem:[#allocation2 + $0x160] sm:$0xff]
    %v31 = vld [vmem:[#allocation2 + $0x168] sm:$0xff]
    %v32 = vld [vmem:[#allocation2 + $0x170] sm:$0xff]
    %v33 = vld [vmem:[#allocation2 + $0x178] sm:$0xff]
    %v34 = vld [vmem:[#allocation2] sm:$0x7f]
    %v35 = vld [vmem:[#allocation2 + $0x8] sm:$0x1]
    %v36 = vperm.slane %v35, 0
    %vm37 = vcmask 56320
    %v39 = vsel %vm37, %v29, 0
    %vm41 = vcmask 1046528
    %v43 = vsel %vm41, %v34, 0
    %45 = vmatpush.msra.mxu0 0.0
    %46 = vmatpush.msra.mxu0 0.0
    %47 = vmatpush.msra.mxu0 0.0
    %48 = vmatpush.msra.mxu0 0.0
    %49 = vmatpush.msra.mxu0 0.0
    %50 = vmatpush.msra.mxu0 0.0
    %51 = vmatpush.msra.mxu0 0.0
    %52 = vmatpush.msra.mxu0 0.0
    %53 = vmatpush.msra.mxu0 0.0
    %54 = vmatpush.msra.mxu0 0.0
    %55 = vmatpush.msra.mxu0 0.0
    %56 = vmatpush.msra.mxu0 0.0
    %57 = vmatpush.msra.mxu0 0.0
    %58 = vmatpush.msra.mxu0 0.0
    %59 = vmatpush.msra.mxu0 0.0
    %60 = vmatpush.msra.mxu0 %v43
    %61 = vmatmul.f32.gmra.mxu0 %v39
    %v62 = vpop.f32.mrf.mxu0
    %v63 = vadd.f32 %v36, %v62
    %64 = vdwg.mxu0
    %v65 = vmax.f32 %v63, 0.0
    %v66 = vld [vmem:[#allocation2 + $0x10] sm:$0xff]
    %v67 = vld [vmem:[#allocation2 + $0x18] sm:$0x3]
    %v68 = vld [vmem:[#allocation2 + $0x20] sm:$0x1]
    %v69 = vperm.slane %v68, 0
    %vm70 = vcmask 80896
    %v72 = vsel %vm70, %v65, 0
    %vm74 = vcmask 1041408
    %v76 = vsel %vm74, %v67, 0
    %78 = vmatpush.msra.mxu0 0.0
    %79 = vmatpush.msra.mxu0 0.0
    %80 = vmatpush.msra.mxu0 0.0
    %81 = vmatpush.msra.mxu0 0.0
    %82 = vmatpush.msra.mxu0 0.0
    %83 = vmatpush.msra.mxu0 0.0
    %84 = vmatpush.msra.mxu0 0.0
    %85 = vmatpush.msra.mxu0 0.0
    %86 = vmatpush.msra.mxu0 0.0
    %87 = vmatpush.msra.mxu0 0.0
    %88 = vmatpush.msra.mxu0 0.0
    %89 = vmatpush.msra.mxu0 0.0
    %90 = vmatpush.msra.mxu0 0.0
    %91 = vmatpush.msra.mxu0 0.0
    %92 = vmatpush.msra.mxu0 %v76
    %93 = vmatpush.msra.mxu0 %v66
    %94 = vmatmul.f32.gmra.mxu0 %v72
    %v95 = vpop.f32.mrf.mxu0
    %v96 = vadd.f32 %v69, %v95
    %97 = vdwg.mxu0
    %v98 = vmax.f32 %v96, 0.0
    %vm99 = vcmask 130048
    %v101 = vsel %vm99, %v30, 0
    %v104 = vsel %vm99, %v31, 0
    %106 = vmatpush.msra.mxu0 0.0
    %107 = vmatpush.msra.mxu0 0.0
    %108 = vmatpush.msra.mxu0 0.0
    %109 = vmatpush.msra.mxu0 0.0
    %110 = vmatpush.msra.mxu0 0.0
    %111 = vmatpush.msra.mxu0 0.0
    %112 = vmatpush.msra.mxu0 0.0
    %113 = vmatpush.msra.mxu0 0.0
    %114 = vmatpush.msra.mxu0 0.0
    %115 = vmatpush.msra.mxu0 0.0
    %116 = vmatpush.msra.mxu0 0.0
    %117 = vmatpush.msra.mxu0 0.0
    %118 = vmatpush.msra.mxu0 0.0
    %119 = vmatpush.msra.mxu0 0.0
    %120 = vmatpush.msra.mxu0 %v28
    %121 = vmatpush.msra.mxu0 %v27
    %122 = vmatmul.f32.gmra.mxu0 %v101
    %v123 = vpop.f32.mrf.mxu0
    %v124 = vadd.f32 0.0, %v123
    %125 = vmatmul.f32.gmra.mxu0 %v104
    %v126 = vpop.f32.mrf.mxu0
    %v127 = vadd.f32 0.0, %v126
    %128 = vdwg.mxu0
    %v129 = vld [vmem:[#allocation2 + $0x28] sm:$0xf]
    %v130 = vld [vmem:[#allocation2 + $0x30] sm:$0x1]
    %v131 = vperm.slane %v130, 0
    %vm132 = vcmask 31744
    %v134 = vsel %vm132, %v124, 0
    %v137 = vsel %vm132, %v127, 0
    %vm139 = vcmask 1043456
    %v141 = vsel %vm139, %v129, 0
    %143 = vmatpush.msra.mxu0 0.0
    %144 = vmatpush.msra.mxu0 0.0
    %145 = vmatpush.msra.mxu0 0.0
    %146 = vmatpush.msra.mxu0 0.0
    %147 = vmatpush.msra.mxu0 0.0
    %148 = vmatpush.msra.mxu0 0.0
    %149 = vmatpush.msra.mxu0 0.0
    %150 = vmatpush.msra.mxu0 0.0
    %151 = vmatpush.msra.mxu0 0.0
    %152 = vmatpush.msra.mxu0 0.0
    %153 = vmatpush.msra.mxu0 0.0
    %154 = vmatpush.msra.mxu0 0.0
    %155 = vmatpush.msra.mxu0 0.0
    %156 = vmatpush.msra.mxu0 0.0
    %157 = vmatpush.msra.mxu0 0.0
    %158 = vmatpush.msra.mxu0 %v141
    %159 = vmatmul.f32.gmra.mxu0 %v134
    %v160 = vpop.f32.mrf.mxu0
    %v161 = vadd.f32 %v131, %v160
    %162 = vmatmul.f32.gmra.mxu0 %v137
    %v163 = vpop.f32.mrf.mxu0
    %v164 = vadd.f32 %v131, %v163
    %165 = vdwg.mxu0
    %vm166 = vcmp.ge.f32.partialorder %v161, 0.0
    %vm167 = vcmp.ge.f32.partialorder %v164, 0.0
    %v168 = vmul.f32 %v161, 0.2
    %v169 = vmul.f32 %v164, 0.2
    %v170 = vsel %vm166, %v161, %v168
    %v171 = vsel %vm167, %v164, %v169
    %v172 = vld [vmem:[#allocation2 + $0x38] sm:$0xff]
    %v173 = vld [vmem:[#allocation2 + $0x40] sm:$0xff]
    %v174 = vld [vmem:[#allocation2 + $0x48] sm:$0xff]
    %v175 = vld [vmem:[#allocation2 + $0x50] sm:$0xff]
    %v176 = vld [vmem:[#allocation2 + $0x58] sm:$0x1]
    %v177 = vperm.slane %v176, 0
    %vm178 = vcmask 261120
    %v180 = vsel %vm178, %v170, 0
    %v183 = vsel %vm178, %v171, 0
    %185 = vmatpush.msra.mxu0 0.0
    %186 = vmatpush.msra.mxu0 0.0
    %187 = vmatpush.msra.mxu0 0.0
    %188 = vmatpush.msra.mxu0 0.0
    %189 = vmatpush.msra.mxu0 0.0
    %190 = vmatpush.msra.mxu0 0.0
    %191 = vmatpush.msra.mxu0 0.0
    %192 = vmatpush.msra.mxu0 0.0
    %193 = vmatpush.msra.mxu0 0.0
    %194 = vmatpush.msra.mxu0 0.0
    %195 = vmatpush.msra.mxu0 0.0
    %196 = vmatpush.msra.mxu0 0.0
    %197 = vmatpush.msra.mxu0 %v175
    %198 = vmatpush.msra.mxu0 %v174
    %199 = vmatpush.msra.mxu0 %v173
    %200 = vmatpush.msra.mxu0 %v172
    %201 = vmatmul.f32.gmra.mxu0 %v180
    %v202 = vpop.f32.mrf.mxu0
    %v203 = vadd.f32 %v177, %v202
    %204 = vmatmul.f32.gmra.mxu0 %v183
    %v205 = vpop.f32.mrf.mxu0
    %v206 = vadd.f32 %v177, %v205
    %207 = vdwg.mxu0
    %vm208 = vcmp.ge.f32.partialorder %v203, 0.0
    %vm209 = vcmp.ge.f32.partialorder %v206, 0.0
    %v210 = vmul.f32 %v203, 0.2
    %v211 = vmul.f32 %v206, 0.2
    %v212 = vsel %vm208, %v203, %v210
    %v213 = vsel %vm209, %v206, %v211
    %214 = vmatpush.msra.mxu0 0.0
    %215 = vmatpush.msra.mxu0 0.0
    %216 = vmatpush.msra.mxu0 0.0
    %217 = vmatpush.msra.mxu0 0.0
    %218 = vmatpush.msra.mxu0 0.0
    %219 = vmatpush.msra.mxu0 0.0
    %220 = vmatpush.msra.mxu0 0.0
    %221 = vmatpush.msra.mxu0 0.0
    %222 = vmatpush.msra.mxu0 0.0
    %223 = vmatpush.msra.mxu0 0.0
    %224 = vmatpush.msra.mxu0 0.0
    %225 = vmatpush.msra.mxu0 0.0
    %226 = vmatpush.msra.mxu0 0.0
    %227 = vmatpush.msra.mxu0 0.0
    %228 = vmatpush.msra.mxu0 %v213
    %229 = vmatpush.msra.mxu0 %v212
    %230 = vmatmul.f32.gmra.mxu0 %v101
    %v231 = vpop.f32.mrf.mxu0
    %v232 = vadd.f32 0.0, %v231
    %233 = vmatmul.f32.gmra.mxu0 %v104
    %v234 = vpop.f32.mrf.mxu0
    %v235 = vadd.f32 0.0, %v234
    %236 = vdwg.mxu0
    %v237 = vld [vmem:[#allocation2 + $0x60] sm:$0xff]
    %v238 = vld [vmem:[#allocation2 + $0x68] sm:$0xff]
    %v239 = vld [vmem:[#allocation2 + $0x70] sm:$0xff]
    %v240 = vld [vmem:[#allocation2 + $0x78] sm:$0xff]
    %v241 = vld [vmem:[#allocation2 + $0x80] sm:$0x1]
    %v242 = vperm.slane %v241, 0
    %v244 = vsel %vm178, %v232, 0
    %v247 = vsel %vm178, %v235, 0
    %249 = vmatpush.msra.mxu0 0.0
    %250 = vmatpush.msra.mxu0 0.0
    %251 = vmatpush.msra.mxu0 0.0
    %252 = vmatpush.msra.mxu0 0.0
    %253 = vmatpush.msra.mxu0 0.0
    %254 = vmatpush.msra.mxu0 0.0
    %255 = vmatpush.msra.mxu0 0.0
    %256 = vmatpush.msra.mxu0 0.0
    %257 = vmatpush.msra.mxu0 0.0
    %258 = vmatpush.msra.mxu0 0.0
    %259 = vmatpush.msra.mxu0 0.0
    %260 = vmatpush.msra.mxu0 0.0
    %261 = vmatpush.msra.mxu0 %v240
    %262 = vmatpush.msra.mxu0 %v239
    %263 = vmatpush.msra.mxu0 %v238
    %264 = vmatpush.msra.mxu0 %v237
    %265 = vmatmul.f32.gmra.mxu0 %v244
    %v266 = vpop.f32.mrf.mxu0
    %v267 = vadd.f32 %v242, %v266
    %268 = vmatmul.f32.gmra.mxu0 %v247
    %v269 = vpop.f32.mrf.mxu0
    %v270 = vadd.f32 %v242, %v269
    %271 = vdwg.mxu0
    %vm272 = vcmp.ge.f32.partialorder %v267, 0.0
    %vm273 = vcmp.ge.f32.partialorder %v270, 0.0
    %v274 = vmul.f32 %v267, 0.2
    %v275 = vmul.f32 %v270, 0.2
    %v276 = vsel %vm272, %v267, %v274
    %v277 = vsel %vm273, %v270, %v275
    %v278 = vld [vmem:[#allocation2 + $0x88] sm:$0xff]
    %v279 = vld [vmem:[#allocation2 + $0x90] sm:$0xff]
    %v280 = vld [vmem:[#allocation2 + $0x98] sm:$0xff]
    %v281 = vld [vmem:[#allocation2 + $0xa0] sm:$0xff]
    %v282 = vld [vmem:[#allocation2 + $0xa8] sm:$0x1]
    %v283 = vperm.slane %v282, 0
    %v285 = vsel %vm178, %v276, 0
    %v288 = vsel %vm178, %v277, 0
    %290 = vmatpush.msra.mxu0 0.0
    %291 = vmatpush.msra.mxu0 0.0
    %292 = vmatpush.msra.mxu0 0.0
    %293 = vmatpush.msra.mxu0 0.0
    %294 = vmatpush.msra.mxu0 0.0
    %295 = vmatpush.msra.mxu0 0.0
    %296 = vmatpush.msra.mxu0 0.0
    %297 = vmatpush.msra.mxu0 0.0
    %298 = vmatpush.msra.mxu0 0.0
    %299 = vmatpush.msra.mxu0 0.0
    %300 = vmatpush.msra.mxu0 0.0
    %301 = vmatpush.msra.mxu0 0.0
    %302 = vmatpush.msra.mxu0 %v281
    %303 = vmatpush.msra.mxu0 %v280
    %304 = vmatpush.msra.mxu0 %v279
    %305 = vmatpush.msra.mxu0 %v278
    %306 = vmatmul.f32.gmra.mxu0 %v285
    %v307 = vpop.f32.mrf.mxu0
    %v308 = vadd.f32 %v283, %v307
    %309 = vmatmul.f32.gmra.mxu0 %v288
    %v310 = vpop.f32.mrf.mxu0
    %v311 = vadd.f32 %v283, %v310
    %312 = vdwg.mxu0
    %vm313 = vcmp.ge.f32.partialorder %v308, 0.0
    %vm314 = vcmp.ge.f32.partialorder %v311, 0.0
    %v315 = vmul.f32 %v308, 0.2
    %v316 = vmul.f32 %v311, 0.2
    %v317 = vsel %vm313, %v308, %v315
    %v318 = vsel %vm314, %v311, %v316
    %v320 = vsel %vm99, %v32, 0
    %322 = vmatpush.msra.mxu0 0.0
    %323 = vmatpush.msra.mxu0 0.0
    %324 = vmatpush.msra.mxu0 0.0
    %325 = vmatpush.msra.mxu0 0.0
    %326 = vmatpush.msra.mxu0 0.0
    %327 = vmatpush.msra.mxu0 0.0
    %328 = vmatpush.msra.mxu0 0.0
    %329 = vmatpush.msra.mxu0 0.0
    %330 = vmatpush.msra.mxu0 0.0
    %331 = vmatpush.msra.mxu0 0.0
    %332 = vmatpush.msra.mxu0 0.0
    %333 = vmatpush.msra.mxu0 0.0
    %334 = vmatpush.msra.mxu0 0.0
    %335 = vmatpush.msra.mxu0 0.0
    %336 = vmatpush.msra.mxu0 %v318
    %337 = vmatpush.msra.mxu0 %v317
    %338 = vmatmul.f32.gmra.mxu0 %v320
    %v339 = vpop.f32.mrf.mxu0
    %v340 = vadd.f32 0.0, %v339
    %341 = vdwg.mxu0
    %v342 = vld [vmem:[#allocation2 + $0xb0] sm:$0x1f]
    %v343 = vld [vmem:[#allocation2 + $0xb8] sm:$0xff]
    %v344 = vld [vmem:[#allocation2 + $0xc0] sm:$0xff]
    %v345 = vld [vmem:[#allocation2 + $0xc8] sm:$0xff]
    %v346 = vld [vmem:[#allocation2 + $0xd0] sm:$0xff]
    %v348 = vsel %vm178, %v340, 0
    %350 = vmatpush.msra.mxu0 0.0
    %351 = vmatpush.msra.mxu0 0.0
    %352 = vmatpush.msra.mxu0 0.0
    %353 = vmatpush.msra.mxu0 0.0
    %354 = vmatpush.msra.mxu0 0.0
    %355 = vmatpush.msra.mxu0 0.0
    %356 = vmatpush.msra.mxu0 0.0
    %357 = vmatpush.msra.mxu0 0.0
    %358 = vmatpush.msra.mxu0 0.0
    %359 = vmatpush.msra.mxu0 0.0
    %360 = vmatpush.msra.mxu0 0.0
    %361 = vmatpush.msra.mxu0 0.0
    %362 = vmatpush.msra.mxu0 %v346
    %363 = vmatpush.msra.mxu0 %v345
    %364 = vmatpush.msra.mxu0 %v344
    %365 = vmatpush.msra.mxu0 %v343
    %366 = vmatmul.f32.gmra.mxu0 %v348
    %v367 = vpop.f32.mrf.mxu0
    %v368 = vadd.f32 0.0, %v367
    %369 = vdwg.mxu0
    %vm370 = vcmask 39936
    %v372 = vsel %vm370, %v98, 0
    %vm374 = vcmask 1044480
    %v376 = vsel %vm374, %v342, 0
    %378 = vmatpush.msra.mxu0 0.0
    %379 = vmatpush.msra.mxu0 0.0
    %380 = vmatpush.msra.mxu0 0.0
    %381 = vmatpush.msra.mxu0 0.0
    %382 = vmatpush.msra.mxu0 0.0
    %383 = vmatpush.msra.mxu0 0.0
    %384 = vmatpush.msra.mxu0 0.0
    %385 = vmatpush.msra.mxu0 0.0
    %386 = vmatpush.msra.mxu0 0.0
    %387 = vmatpush.msra.mxu0 0.0
    %388 = vmatpush.msra.mxu0 0.0
    %389 = vmatpush.msra.mxu0 0.0
    %390 = vmatpush.msra.mxu0 0.0
    %391 = vmatpush.msra.mxu0 0.0
    %392 = vmatpush.msra.mxu0 0.0
    %393 = vmatpush.msra.mxu0 %v376
    %394 = vmatmul.f32.gmra.mxu0 %v372
    %v395 = vpop.f32.mrf.mxu0
    %v396 = vadd.f32 %v368, %v395
    %397 = vdwg.mxu0
    %v398 = vld [vmem:[#allocation2 + $0xd8] sm:$0x1]
    %v399 = vperm.slane %v398, 0
    %v400 = vadd.f32 %v396, %v399
    %v401 = vld [vmem:[#allocation2 + $0xe0] sm:$0xff]
    %v402 = vld [vmem:[#allocation2 + $0xe8] sm:$0xff]
    %v403 = vld [vmem:[#allocation2 + $0xf0] sm:$0xff]
    %v404 = vld [vmem:[#allocation2 + $0xf8] sm:$0xff]
    %v405 = vld [vmem:[#allocation2 + $0x100] sm:$0x1]
    %v406 = vperm.slane %v405, 0
    %v408 = vsel %vm178, %v400, 0
    %410 = vmatpush.msra.mxu0 0.0
    %411 = vmatpush.msra.mxu0 0.0
    %412 = vmatpush.msra.mxu0 0.0
    %413 = vmatpush.msra.mxu0 0.0
    %414 = vmatpush.msra.mxu0 0.0
    %415 = vmatpush.msra.mxu0 0.0
    %416 = vmatpush.msra.mxu0 0.0
    %417 = vmatpush.msra.mxu0 0.0
    %418 = vmatpush.msra.mxu0 0.0
    %419 = vmatpush.msra.mxu0 0.0
    %420 = vmatpush.msra.mxu0 0.0
    %421 = vmatpush.msra.mxu0 0.0
    %422 = vmatpush.msra.mxu0 %v404
    %423 = vmatpush.msra.mxu0 %v403
    %424 = vmatpush.msra.mxu0 %v402
    %425 = vmatpush.msra.mxu0 %v401
    %426 = vmatmul.f32.gmra.mxu0 %v408
    %v427 = vpop.f32.mrf.mxu0
    %v428 = vadd.f32 %v406, %v427
    %429 = vdwg.mxu0
    %v430 = vmax.f32 %v428, 0.0
    %v431 = vld [vmem:[#allocation2 + $0x108] sm:$0x1f]
    %v432 = vld [vmem:[#allocation2 + $0x110] sm:$0xff]
    %v433 = vld [vmem:[#allocation2 + $0x118] sm:$0xff]
    %v434 = vld [vmem:[#allocation2 + $0x120] sm:$0xff]
    %v435 = vld [vmem:[#allocation2 + $0x128] sm:$0xff]
    %v437 = vsel %vm178, %v430, 0
    %439 = vmatpush.msra.mxu0 0.0
    %440 = vmatpush.msra.mxu0 0.0
    %441 = vmatpush.msra.mxu0 0.0
    %442 = vmatpush.msra.mxu0 0.0
    %443 = vmatpush.msra.mxu0 0.0
    %444 = vmatpush.msra.mxu0 0.0
    %445 = vmatpush.msra.mxu0 0.0
    %446 = vmatpush.msra.mxu0 0.0
    %447 = vmatpush.msra.mxu0 0.0
    %448 = vmatpush.msra.mxu0 0.0
    %449 = vmatpush.msra.mxu0 0.0
    %450 = vmatpush.msra.mxu0 0.0
    %451 = vmatpush.msra.mxu0 %v435
    %452 = vmatpush.msra.mxu0 %v434
    %453 = vmatpush.msra.mxu0 %v433
    %454 = vmatpush.msra.mxu0 %v432
    %455 = vmatmul.f32.gmra.mxu0 %v437
    %v456 = vpop.f32.mrf.mxu0
    %v457 = vadd.f32 0.0, %v456
    %458 = vdwg.mxu0
    %459 = vrot.lane.b32.xlu0 %v98, 123
    %v460 = vpop.permute.xlu0 %459
    %v461 = vsel %vm370, %v460, 0
    %v464 = vsel %vm374, %v431, 0
    %466 = vmatpush.msra.mxu0 0.0
    %467 = vmatpush.msra.mxu0 0.0
    %468 = vmatpush.msra.mxu0 0.0
    %469 = vmatpush.msra.mxu0 0.0
    %470 = vmatpush.msra.mxu0 0.0
    %471 = vmatpush.msra.mxu0 0.0
    %472 = vmatpush.msra.mxu0 0.0
    %473 = vmatpush.msra.mxu0 0.0
    %474 = vmatpush.msra.mxu0 0.0
    %475 = vmatpush.msra.mxu0 0.0
    %476 = vmatpush.msra.mxu0 0.0
    %477 = vmatpush.msra.mxu0 0.0
    %478 = vmatpush.msra.mxu0 0.0
    %479 = vmatpush.msra.mxu0 0.0
    %480 = vmatpush.msra.mxu0 0.0
    %481 = vmatpush.msra.mxu0 %v464
    %482 = vmatmul.f32.gmra.mxu0 %v461
    %v483 = vpop.f32.mrf.mxu0
    %v484 = vadd.f32 %v457, %v483
    %485 = vdwg.mxu0
    %v486 = vld [vmem:[#allocation2 + $0x130] sm:$0x1]
    %v487 = vperm.slane %v486, 0
    %v488 = vadd.f32 %v484, %v487
    %v489 = vmax.f32 %v488, 0.0
    %v490 = vld [vmem:[#allocation2 + $0x138] sm:$0xff]
    %v491 = vld [vmem:[#allocation2 + $0x140] sm:$0xff]
    %v492 = vld [vmem:[#allocation2 + $0x148] sm:$0xff]
    %v493 = vld [vmem:[#allocation2 + $0x150] sm:$0xff]
    %v494 = vld [vmem:[#allocation2 + $0x158] sm:$0x1]
    %v495 = vperm.slane %v494, 0
    %v497 = vsel %vm178, %v489, 0
    %499 = vmatpush.msra.mxu0 0.0
    %500 = vmatpush.msra.mxu0 0.0
    %501 = vmatpush.msra.mxu0 0.0
    %502 = vmatpush.msra.mxu0 0.0
    %503 = vmatpush.msra.mxu0 0.0
    %504 = vmatpush.msra.mxu0 0.0
    %505 = vmatpush.msra.mxu0 0.0
    %506 = vmatpush.msra.mxu0 0.0
    %507 = vmatpush.msra.mxu0 0.0
    %508 = vmatpush.msra.mxu0 0.0
    %509 = vmatpush.msra.mxu0 0.0
    %510 = vmatpush.msra.mxu0 0.0
    %511 = vmatpush.msra.mxu0 %v493
    %512 = vmatpush.msra.mxu0 %v492
    %513 = vmatpush.msra.mxu0 %v491
    %514 = vmatpush.msra.mxu0 %v490
    %515 = vmatmul.f32.gmra.mxu0 %v497
    %v516 = vpop.f32.mrf.mxu0
    %v517 = vadd.f32 %v495, %v516
    %518 = vdwg.mxu0
    %v519 = vadd.f32 %v517, %v33
    %vm520 = vcmp.ge.f32.partialorder %v519, 0.0
    %v521 = vsel %vm520, 1.0, 0.0
    %522 = vst [vmem:[%s2] sm:$0xff] %v521
    // Predicated region
    $region14: #{cond_vae_forward.1} parent=1 // pred_check
      _
    $region15: #{cond_vae_forward.1} parent=1 // pred_check_branch
      %524 = sbr.rel (0) target = $region17
    $region16: #{cond_vae_forward.1} parent=1 // pred_region
      _
    $region17: #{cond_vae_forward.1} parent=1 // pred_fallthru
      _
    // Predicated region
    $region18: #{cond_vae_forward.1} parent=1 // pred_check
      _
    $region19: #{cond_vae_forward.1} parent=1 // pred_check_branch
      %526 = sbr.rel (0) target = $region21
    $region20: #{cond_vae_forward.1} parent=1 // pred_region
      _
    $region21: #{cond_vae_forward.1} parent=1 // pred_fallthru
      _
    %527 = vsyncpa [#allocation3], 1

</llo_original>
